<compile_context>
chip_gen: v7x
topology: tpu7x:2x2x1
jax: 0.10.0
libtpu: 0.0.40
codegen_flags: <defaults>
</compile_context>

<pallas_src>
import functools

import jax
import jax.numpy as jnp
from jax.experimental import pallas as pl
from jax.experimental.pallas import tpu as pltpu


def _vq_kernel(x_ref, w_ref, w2h_ref,                 # inputs
               q_ref, enc_ref, sse_ref, cnt_ref,      # outputs
               *, tile_m, n_total, needs_mask, use_bf16_matmul):
    i = pl.program_id(0)

    x_in = x_ref[...]                                  # (TM, D), native dtype
    w_in = w_ref[...]                                  # (K, D),  native dtype
    x = x_in.astype(jnp.float32)                       # f32 copy for diff / SSE
    w = w_in.astype(jnp.float32)                       # f32 codebook (exact gather)
    w2h = w2h_ref[...]                                 # (1, K) precomputed 0.5*|w|^2

    # Distance matmul operands: keep native bf16 if allowed (no f32 round-trip),
    # otherwise use the f32 copies.
    if use_bf16_matmul:
        xd = x_in if x_in.dtype == jnp.bfloat16 else x_in.astype(jnp.bfloat16)
        wd = w_in if w_in.dtype == jnp.bfloat16 else w_in.astype(jnp.bfloat16)
    else:
        xd, wd = x, w

    # x (TM, D) contracted with w (K, D) on D -> (TM, K); no transposed copy.
    xwT = jax.lax.dot_general(xd, wd, (((1,), (1,)), ((), ())),
                              preferred_element_type=jnp.float32)
    # Argmin-invariant distance: 0.5*(|w|^2 - 2 x.w^T); |x|^2 row-constant dropped.
    dist = w2h - xwT                                   # (TM, K)

    # Nearest codebook entry (first-min tie-break, matching torch.argmin).
    idx = jnp.argmin(dist, axis=1, keepdims=True)                  # (TM, 1)
    k_iota = jax.lax.broadcasted_iota(jnp.int32, dist.shape, 1)    # (TM, K)
    enc = (k_iota == idx).astype(jnp.float32)                      # one-hot

    # Codebook gather as one-hot matmul (exact f32, MXU-friendly).
    quant = jnp.dot(enc, w, preferred_element_type=jnp.float32)    # (TM, D)

    q_ref[...] = quant.astype(q_ref.dtype)
    enc_ref[...] = enc.astype(enc_ref.dtype)

    # Per-tile partial reductions; scalar loss / perplexity finished in plain JAX
    # so this grid axis stays fully "parallel" (megacore-friendly).
    diff = quant - x

    def _emit(diff_v, enc_v):
        sse_ref[...] = jnp.sum(diff_v * diff_v).reshape(1, 1, 1)
        cnt_ref[...] = jnp.sum(enc_v, axis=0).reshape(1, 1, -1)

    if needs_mask:
        is_last = i == pl.num_programs(0) - 1

        @pl.when(is_last)
        def _():  # tail tile: ignore padded rows past n_total
            row_ids = i * tile_m + jax.lax.broadcasted_iota(
                jnp.int32, (tile_m, 1), 0)
            valid = row_ids < n_total                              # (TM, 1) bool
            _emit(jnp.where(valid, diff, 0.0), jnp.where(valid, enc, 0.0))

        @pl.when(jnp.logical_not(is_last))
        def _():  # full tiles: unmasked fast path
            _emit(diff, enc)
    else:
        _emit(diff, enc)


def vector_quantizer(inputs, embedding_weight, commitment_cost, *,
                     tile_m=512, use_bf16_matmul=None,
                     encodings_dtype=jnp.float32):
    """Pallas VQ forward.

    inputs:           (N, D) float
    embedding_weight: (K, D) float
    returns (loss, quantized(N, D), perplexity, encodings(N, K))
    """
    n, d = inputs.shape
    k, d2 = embedding_weight.shape
    assert d == d2

    in_itemsize = jnp.dtype(inputs.dtype).itemsize
    w_itemsize = jnp.dtype(embedding_weight.dtype).itemsize
    enc_itemsize = jnp.dtype(encodings_dtype).itemsize

    # bf16 distance matmul: auto-on only when both operands are already bf16
    # (keeps argmin bit-parity with the f32 torch reference for f32 inputs).
    if use_bf16_matmul is None:
        use_bf16_matmul = (inputs.dtype == jnp.bfloat16
                           and embedding_weight.dtype == jnp.bfloat16)

    # Sublane packing multiple: 8 rows for 4-byte dtypes, 16 for 2-byte, 32 for 1-byte.
    sub = max(8, 32 // max(1, in_itemsize))

    def round_up(v, m):
        return ((v + m - 1) // m) * m

    # --- tile_m selection ---------------------------------------------------
    tile_m = max(1, min(tile_m, n))
    if tile_m < n:
        tile_m = max(sub, (tile_m // sub) * sub)
    # Megacore (v7x has 2 TensorCores): keep the parallel grid >= 2 when N allows.
    if pl.cdiv(n, tile_m) < 2 and n >= 2 * sub:
        tile_m = round_up(pl.cdiv(n, 2), sub)

    # Per-step VMEM estimate (codebook single-buffered thanks to Buffered(1)).
    def vmem_bytes(tm):
        x_buf = 2 * tm * d * in_itemsize           # input tile (double-buffered)
        q_buf = 2 * tm * d * in_itemsize           # quantized tile (double-buffered)
        enc_buf = 2 * tm * k * enc_itemsize        # encodings tile (double-buffered)
        w_buf = k * d * w_itemsize                 # codebook (single-buffered)
        w2_buf = k * 4                             # 0.5*|w|^2
        part = 2 * (4 + k * 4)                     # per-tile sse / code counts
        interm = 2 * tm * k * 4 + 3 * tm * d * 4   # dist, one-hot, f32 working copies
        return x_buf + q_buf + enc_buf + w_buf + w2_buf + part + interm

    VMEM_BUDGET = 32 << 20                         # safe across v5e/v6e/v7x
    while tile_m > sub and vmem_bytes(tile_m) > VMEM_BUDGET:
        tile_m = max(sub, (tile_m // 2 // sub) * sub)

    grid_m = pl.cdiv(n, tile_m)
    needs_mask = (n % tile_m) != 0

    # Explicit scoped-VMEM limit: real budget + headroom, capped well under
    # v7x's 64 MiB physical VMEM.
    vmem_limit = int(min(48 << 20, max(24 << 20, 1.5 * vmem_bytes(tile_m))))

    # 0.5*|w|^2 is constant across the grid: compute once here (argmin is
    # invariant under positive scaling, so the 2x factor is folded away).
    w2_half = 0.5 * jnp.sum(
        embedding_weight.astype(jnp.float32) ** 2, axis=1)[None, :]   # (1, K)

    kernel = functools.partial(
        _vq_kernel, tile_m=tile_m, n_total=n,
        needs_mask=needs_mask, use_bf16_matmul=use_bf16_matmul)

    quantized, encodings, sse_p, cnt_p = pl.pallas_call(
        kernel,
        out_shape=(
            jax.ShapeDtypeStruct((n, d), inputs.dtype),         # quantized
            jax.ShapeDtypeStruct((n, k), encodings_dtype),      # encodings (one-hot)
            jax.ShapeDtypeStruct((grid_m, 1, 1), jnp.float32),  # per-tile SSE
            jax.ShapeDtypeStruct((grid_m, 1, k), jnp.float32),  # per-tile code counts
        ),
        grid_spec=pltpu.PrefetchScalarGridSpec(
            num_scalar_prefetch=0,
            grid=(grid_m,),
            in_specs=[
                pl.BlockSpec((tile_m, d), lambda i: (i, 0)),    # x tile
                pl.BlockSpec((k, d), lambda i: (0, 0),          # codebook (constant)
                             pipeline_mode=pl.Buffered(1)),
                pl.BlockSpec((1, k), lambda i: (0, 0),          # 0.5*|w|^2 (constant)
                             pipeline_mode=pl.Buffered(1)),
            ],
            out_specs=[
                pl.BlockSpec((tile_m, d), lambda i: (i, 0)),
                pl.BlockSpec((tile_m, k), lambda i: (i, 0)),
                pl.BlockSpec((1, 1, 1), lambda i: (i, 0, 0)),
                pl.BlockSpec((1, 1, k), lambda i: (i, 0, 0)),
            ],
        ),
        compiler_params=pltpu.CompilerParams(
            dimension_semantics=("parallel",),   # independent row tiles -> megacore
            vmem_limit_bytes=vmem_limit),
    )(inputs, embedding_weight, w2_half)

    # Finalize tiny scalar reductions in plain JAX.
    mse = jnp.sum(sse_p) / jnp.float32(n * d)
    loss = (1.0 + float(commitment_cost)) * mse
    avg_probs = jnp.sum(cnt_p, axis=0).reshape(-1) / jnp.float32(n)   # (K,)
    perplexity = jnp.exp(-jnp.sum(avg_probs * jnp.log(avg_probs + 1e-10)))
    return loss, quantized, perplexity, encodings


def _reference(inputs, w, commitment_cost):
    """Plain-JAX reference mirroring the torch forward (values only)."""
    dist = (jnp.sum(inputs ** 2, axis=1, keepdims=True)
            + jnp.sum(w ** 2, axis=1)
            - 2.0 * inputs @ w.T)
    idx = jnp.argmin(dist, axis=1)
    enc = jax.nn.one_hot(idx, w.shape[0], dtype=jnp.float32)
    quant = enc @ w
    mse = jnp.mean((quant - inputs) ** 2)
    loss = (1.0 + commitment_cost) * mse
    avg = jnp.mean(enc, axis=0)
    perp = jnp.exp(-jnp.sum(avg * jnp.log(avg + 1e-10)))
    return loss, quant, perp, enc


if __name__ == "__main__":
    num_embeddings = 64     # K
    embedding_dim = 32      # D
    commitment_cost = 0.25
    N = 256                 # e.g. batch=2 flattened over an 8x16 latent grid

    key = jax.random.PRNGKey(0)
    kx, kw = jax.random.split(key)
    x = jax.random.normal(kx, (N, embedding_dim), dtype=jnp.float32)
    # nn.Embedding weight init: uniform(-1/K, 1/K), deterministic here.
    w = jax.random.uniform(kw, (num_embeddings, embedding_dim),
                           minval=-1.0 / num_embeddings,
                           maxval=1.0 / num_embeddings,
                           dtype=jnp.float32)

    loss, quantized, perplexity, encodings = vector_quantizer(
        x, w, commitment_cost)
    jax.block_until_ready((loss, quantized, perplexity, encodings))

    # sanity-check against plain-JAX reference
    rl, rq, rp, re = _reference(x, w, commitment_cost)
    assert jnp.allclose(loss, rl, atol=1e-5), (loss, rl)
    assert jnp.allclose(quantized, rq, atol=1e-5)
    assert jnp.allclose(perplexity, rp, atol=1e-4), (perplexity, rp)
    assert jnp.allclose(encodings, re)

    # secondary check: ragged N exercises the pl.when tail-mask path
    N2 = 200
    x2 = jax.random.normal(jax.random.PRNGKey(1), (N2, embedding_dim),
                           dtype=jnp.float32)
    l2, q2, p2, e2 = vector_quantizer(x2, w, commitment_cost)
    jax.block_until_ready((l2, q2, p2, e2))
    rl2, rq2, rp2, re2 = _reference(x2, w, commitment_cost)
    assert jnp.allclose(l2, rl2, atol=1e-5), (l2, rl2)
    assert jnp.allclose(q2, rq2, atol=1e-5)
    assert jnp.allclose(p2, rp2, atol=1e-4), (p2, rp2)
    assert jnp.allclose(e2, re2)

    print("KERNEL_OK")
</pallas_src>

<mosaic_0001>
module attributes {stable_mosaic.version = 11 : i64} {
  func.func @_vq_kernel(%arg0: i32, %arg1: memref<128x32xf32, #tpu.memory_space<vmem>>, %arg2: memref<64x32xf32, #tpu.memory_space<vmem>>, %arg3: memref<1x64xf32, #tpu.memory_space<vmem>>, %arg4: memref<128x32xf32, #tpu.memory_space<vmem>>, %arg5: memref<128x64xf32, #tpu.memory_space<vmem>>, %arg6: memref<1x1x1xf32, #tpu.memory_space<vmem>>, %arg7: memref<1x1x64xf32, #tpu.memory_space<vmem>>) attributes {dimension_semantics = [#tpu.dimension_semantics<parallel>], iteration_bounds = array<i64: 2>, scalar_prefetch = 0 : i64, scratch_operands = 0 : i64, tpu.core_type = #tpu.core_type<tc>, window_params = [{transform_indices = @transform_0, window_bounds = array<i64: 128, 32>}, {pipeline_mode = #tpu.pipeline_mode<synchronous>, transform_indices = @transform_1, window_bounds = array<i64: 64, 32>}, {pipeline_mode = #tpu.pipeline_mode<synchronous>, transform_indices = @transform_2, window_bounds = array<i64: 1, 64>}, {transform_indices = @transform_3, window_bounds = array<i64: 128, 32>}, {transform_indices = @transform_4, window_bounds = array<i64: 128, 64>}, {transform_indices = @transform_5, window_bounds = array<i64: 1, 1, 1>}, {transform_indices = @transform_6, window_bounds = array<i64: 1, 1, 64>}]} {
    %c0 = arith.constant 0 : index
    %c0_0 = arith.constant 0 : index
    %0 = vector.load %arg1[%c0, %c0_0] : memref<128x32xf32, #tpu.memory_space<vmem>>, vector<128x32xf32>
    %c0_1 = arith.constant 0 : index
    %c0_2 = arith.constant 0 : index
    %1 = vector.load %arg2[%c0_1, %c0_2] : memref<64x32xf32, #tpu.memory_space<vmem>>, vector<64x32xf32>
    %c0_3 = arith.constant 0 : index
    %c0_4 = arith.constant 0 : index
    %2 = vector.load %arg3[%c0_3, %c0_4] : memref<1x64xf32, #tpu.memory_space<vmem>>, vector<1x64xf32>
    %cst = arith.constant dense<0.000000e+00> : vector<128x64xf32>
    %3 = tpu.matmul %0, %1, %cst {dimension_numbers = #tpu.dot_dimension_numbers<[1], [1], [0], [0], [0, 0, 1, 0], [], []>} : vector<128x32xf32>, vector<64x32xf32>, vector<128x64xf32> -> vector<128x64xf32>
    %4 = vector.broadcast %2 : vector<1x64xf32> to vector<128x64xf32>
    %5 = arith.subf %4, %3 : vector<128x64xf32>
    %6 = tpu.reduce_index %5 {axis = 1 : i32, kind = #tpu.reduction_kind<arg_min>} : vector<128x64xf32> -> vector<128xi32>
    %7 = vector.shape_cast %6 : vector<128xi32> to vector<128x1xi32>
    %8 = tpu.iota {dimensions = array<i32: 1>} : vector<128x64xi32>
    %9 = vector.broadcast %7 : vector<128x1xi32> to vector<128x64xi32>
    %10 = arith.cmpi eq, %8, %9 : vector<128x64xi32>
    %11 = arith.extui %10 : vector<128x64xi1> to vector<128x64xi32>
    %12 = arith.sitofp %11 : vector<128x64xi32> to vector<128x64xf32>
    %cst_5 = arith.constant dense<0.000000e+00> : vector<128x32xf32>
    %13 = tpu.matmul %12, %1, %cst_5 {dimension_numbers = #tpu.dot_dimension_numbers<[1], [0], [0], [1], [0, 0, 1, 1], [], []>} : vector<128x64xf32>, vector<64x32xf32>, vector<128x32xf32> -> vector<128x32xf32>
    %c0_6 = arith.constant 0 : index
    %c0_7 = arith.constant 0 : index
    %14 = vector.load %arg4[%c0_6, %c0_7] : memref<128x32xf32, #tpu.memory_space<vmem>>, vector<128x32xf32>
    tpu.vector_store %arg4[%c0_6, %c0_7], %13 {strides = array<i32>} : memref<128x32xf32, #tpu.memory_space<vmem>>, vector<128x32xf32>,
    %c0_8 = arith.constant 0 : index
    %c0_9 = arith.constant 0 : index
    %15 = vector.load %arg5[%c0_8, %c0_9] : memref<128x64xf32, #tpu.memory_space<vmem>>, vector<128x64xf32>
    tpu.vector_store %arg5[%c0_8, %c0_9], %12 {strides = array<i32>} : memref<128x64xf32, #tpu.memory_space<vmem>>, vector<128x64xf32>,
    %16 = arith.subf %13, %0 : vector<128x32xf32>
    %17 = arith.mulf %16, %16 : vector<128x32xf32>
    %18 = vector.shape_cast %17 : vector<128x32xf32> to vector<1x128x32xf32>
    %cst_10 = arith.constant dense<0.000000e+00> : vector<1xf32>
    %19 = vector.multi_reduction <add>, %18, %cst_10 [1, 2] : vector<1x128x32xf32> to vector<1xf32>
    %20 = vector.shape_cast %19 : vector<1xf32> to vector<1x1x1xf32>
    %21 = vector.extract %20[0, 0, 0] : f32 from vector<1x1x1xf32>
    %22 = vector.broadcast %21 : f32 to vector<1x1x1xf32>
    %c0_11 = arith.constant 0 : index
    %c0_12 = arith.constant 0 : index
    %c0_13 = arith.constant 0 : index
    %23 = vector.load %arg6[%c0_11, %c0_12, %c0_13] : memref<1x1x1xf32, #tpu.memory_space<vmem>>, vector<1x1x1xf32>
    tpu.vector_store %arg6[%c0_11, %c0_12, %c0_13], %22 {strides = array<i32>} : memref<1x1x1xf32, #tpu.memory_space<vmem>>, vector<1x1x1xf32>,
    %cst_14 = arith.constant dense<0.000000e+00> : vector<64xf32>
    %24 = vector.multi_reduction <add>, %12, %cst_14 [0] : vector<128x64xf32> to vector<64xf32>
    %25 = vector.shape_cast %24 : vector<64xf32> to vector<1x1x64xf32>
    %c0_15 = arith.constant 0 : index
    %c0_16 = arith.constant 0 : index
    %c0_17 = arith.constant 0 : index
    %26 = vector.load %arg7[%c0_15, %c0_16, %c0_17] : memref<1x1x64xf32, #tpu.memory_space<vmem>>, vector<1x1x64xf32>
    tpu.vector_store %arg7[%c0_15, %c0_16, %c0_17], %25 {strides = array<i32>} : memref<1x1x64xf32, #tpu.memory_space<vmem>>, vector<1x1x64xf32>,
    return
  }
  func.func @transform_0(%arg0: i32) -> (i32, i32) {
    %c0_i32 = arith.constant 0 : i32
    %c0_i32_0 = arith.constant 0 : i32
    return %arg0, %c0_i32 : i32, i32
  }
  func.func @transform_1(%arg0: i32) -> (i32, i32) {
    %c0_i32 = arith.constant 0 : i32
    %c0_i32_0 = arith.constant 0 : i32
    %c0_i32_1 = arith.constant 0 : i32
    return %c0_i32, %c0_i32_0 : i32, i32
  }
  func.func @transform_2(%arg0: i32) -> (i32, i32) {
    %c0_i32 = arith.constant 0 : i32
    %c0_i32_0 = arith.constant 0 : i32
    %c0_i32_1 = arith.constant 0 : i32
    return %c0_i32, %c0_i32_0 : i32, i32
  }
  func.func @transform_3(%arg0: i32) -> (i32, i32) {
    %c0_i32 = arith.constant 0 : i32
    %c0_i32_0 = arith.constant 0 : i32
    return %arg0, %c0_i32 : i32, i32
  }
  func.func @transform_4(%arg0: i32) -> (i32, i32) {
    %c0_i32 = arith.constant 0 : i32
    %c0_i32_0 = arith.constant 0 : i32
    return %arg0, %c0_i32 : i32, i32
  }
  func.func @transform_5(%arg0: i32) -> (i32, i32, i32) {
    %c0_i32 = arith.constant 0 : i32
    %c0_i32_0 = arith.constant 0 : i32
    %c0_i32_1 = arith.constant 0 : i32
    return %arg0, %c0_i32, %c0_i32_0 : i32, i32, i32
  }
  func.func @transform_6(%arg0: i32) -> (i32, i32, i32) {
    %c0_i32 = arith.constant 0 : i32
    %c0_i32_0 = arith.constant 0 : i32
    %c0_i32_1 = arith.constant 0 : i32
    return %arg0, %c0_i32, %c0_i32_0 : i32, i32, i32
  }
}

</mosaic_0001>

<llo_original>
// kernel: tpu_custom_call.1
$region0: #{tpu_custom_call.1}
  #allocation0 [shape = 'u32[]', space=smem, size = 0x4, offset = 0x4, fixed_abs, tag = 'smem constant byte address 0x4 - core index']
  #allocation1 [shape = 'u32[144,128]{1,0:T(1,128)}', space=vmem, size = 0x12000, scoped, tag = 'internal scratch']
  %s0 = inlined_call_operand.vmem [shape: f32[256,32], index: 0, kind: input, shape index: {}]
  %s1 = inlined_call_operand.vmem [shape: f32[64,32], index: 1, kind: input, shape index: {}]
  %s2 = inlined_call_operand.vmem [shape: f32[1,64], index: 2, kind: input, shape index: {}]
  %s3 = inlined_call_operand.vmem [shape: f32[256,32], index: 3, kind: output, shape index: {0}]
  %s4 = inlined_call_operand.vmem [shape: f32[256,64], index: 4, kind: output, shape index: {1}]
  %s5 = inlined_call_operand.vmem [shape: f32[2,1,1], index: 5, kind: output, shape index: {2}]
  %s6 = inlined_call_operand.hbm [shape: f32[2,1,64], index: 6, kind: output, shape index: {3}]
  %7 = xla_tuple %s3, %s4, %s5, %s6
  %s8 = sld [smem:[#allocation0]]
  $region69: #{tpu_custom_call.1} parent=0
    _
  %s10 = ssub.s32 1, %s8
  %s11 = scalar_select 0, %s10, %s8
  $region1: #{tpu_custom_call.1} parent=0
    #allocation2 [shape = 'u8[1024]{0}', space=vmem, size = 0x400, scoped, tag = 'output window, operand 3']
    #allocation3 [shape = 's32[2]{0}', space=sflag, size = 0x8, scoped, tag = 'scoped memory for tpu_custom_call.1']
    %12 = vsyncpa [#allocation3], 0
    %s13 = scalar_lea.sflag [#allocation3], 1
    %14 = vsyncpa %s13, 0
    loop: start=0, step=1, limit=4
    $region2: #{tpu_custom_call.1} parent=1 // loop_pre_header
      _
    $region3: #{tpu_custom_call.1} parent=1 // loop_header
      %s16 = sphi 0, %s20
      %p17 = scmp.ge.s32.totalorder %s16, 4
      %s26 = sphi 0, %s28
      %s29 = sphi 0, %s26
      %s30 = sphi 0, %s29
      %s46 = sphi 0, %s30
      %s50 = sphi 0, %s50
      %s52 = sphi 0, %s50
      %s53 = sphi 0, %s52
      %s67 = sphi 0, %s53
      %s71 = sphi 0, %s71
      %s73 = sphi 0, %s71
      %s74 = sphi 0, %s73
      %s88 = sphi 0, %s74
      %s94 = sphi 0, %s96
      %s97 = sphi 0, %s94
      %s98 = sphi 0, %s97
      %s114 = sphi 0, %s98
      %s120 = sphi 0, %s122
      %s123 = sphi 0, %s120
      %s124 = sphi 0, %s123
      %s140 = sphi 0, %s124
      %s146 = sphi 0, %s148
      %s149 = sphi 0, %s146
      %s150 = sphi 0, %s149
      %s166 = sphi 0, %s150
      %s172 = sphi 0, %s174
      %s175 = sphi 0, %s172
      %s176 = sphi 0, %s175
      %s192 = sphi 0, %s176
    $region4: #{tpu_custom_call.1} parent=1 // loop_header_branch
      %19 = sbr.rel (%p17) target = $region8
    $region5: #{tpu_custom_call.1} parent=1 // loop_body
      %s21 = ssub.s32 %s16, 1
      %s22 = ssub.s32 %s16, 2
      %s23 = sadd.s32 %s16, 1
      %s24 = ssub.s32 %s16, %s23
      %p25 = scmp.eq.s32.totalorder %s24, 0
      %s27 = sadd.s32 %s26, 1
      %s28 = scalar_select %p25, %s26, %s27
      %p31 = pneg %p25
      %p32 = scmp.eq.s32.totalorder %s16, 1
      %p33 = por %p31, %p32
      %p34 = scmp.ne.s32.totalorder %s26, %s29
      %p35 = scmp.eq.s32.totalorder %s16, 0
      %p36 = por %p34, %p35
      %p37 = scmp.ne.s32.totalorder %s26, %s29
      %p38 = scmp.eq.s32.totalorder %s21, 1
      %p39 = por %p37, %p38
      %p40 = scmp.ne.s32.totalorder %s29, %s30
      %p41 = scmp.eq.s32.totalorder %s21, 0
      %p42 = por %p40, %p41
      %p43 = scmp.ne.s32.totalorder %s29, %s30
      %p44 = scmp.eq.s32.totalorder %s22, 1
      %p45 = por %p43, %p44
      %p47 = scmp.ne.s32.totalorder %s30, %s46
      %p48 = scmp.eq.s32.totalorder %s22, 0
      %p49 = por %p47, %p48
      %s51 = sadd.s32 %s50, 1
      %p54 = scmp.eq.s32.totalorder %s16, 1
      %p55 = scmp.ne.s32.totalorder %s50, %s52
      %p56 = scmp.eq.s32.totalorder %s16, 0
      %p57 = por %p55, %p56
      %p58 = scmp.ne.s32.totalorder %s50, %s52
      %p59 = scmp.eq.s32.totalorder %s21, 1
      %p60 = por %p58, %p59
      %p61 = scmp.ne.s32.totalorder %s52, %s53
      %p62 = scmp.eq.s32.totalorder %s21, 0
      %p63 = por %p61, %p62
      %p64 = scmp.ne.s32.totalorder %s52, %s53
      %p65 = scmp.eq.s32.totalorder %s22, 1
      %p66 = por %p64, %p65
      %p68 = scmp.ne.s32.totalorder %s53, %s67
      %p69 = scmp.eq.s32.totalorder %s22, 0
      %p70 = por %p68, %p69
      %s72 = sadd.s32 %s71, 1
      %p75 = scmp.eq.s32.totalorder %s16, 1
      %p76 = scmp.ne.s32.totalorder %s71, %s73
      %p77 = scmp.eq.s32.totalorder %s16, 0
      %p78 = por %p76, %p77
      %p79 = scmp.ne.s32.totalorder %s71, %s73
      %p80 = scmp.eq.s32.totalorder %s21, 1
      %p81 = por %p79, %p80
      %p82 = scmp.ne.s32.totalorder %s73, %s74
      %p83 = scmp.eq.s32.totalorder %s21, 0
      %p84 = por %p82, %p83
      %p85 = scmp.ne.s32.totalorder %s73, %s74
      %p86 = scmp.eq.s32.totalorder %s22, 1
      %p87 = por %p85, %p86
      %p89 = scmp.ne.s32.totalorder %s74, %s88
      %p90 = scmp.eq.s32.totalorder %s22, 0
      %p91 = por %p89, %p90
      %s92 = ssub.s32 %s16, %s23
      %p93 = scmp.eq.s32.totalorder %s92, 0
      %s95 = sadd.s32 %s94, 1
      %s96 = scalar_select %p93, %s94, %s95
      %p99 = pneg %p93
      %p100 = scmp.eq.s32.totalorder %s16, 1
      %p101 = por %p99, %p100
      %p102 = scmp.ne.s32.totalorder %s94, %s97
      %p103 = scmp.eq.s32.totalorder %s16, 0
      %p104 = por %p102, %p103
      %p105 = scmp.ne.s32.totalorder %s94, %s97
      %p106 = scmp.eq.s32.totalorder %s21, 1
      %p107 = por %p105, %p106
      %p108 = scmp.ne.s32.totalorder %s97, %s98
      %p109 = scmp.eq.s32.totalorder %s21, 0
      %p110 = por %p108, %p109
      %p111 = scmp.ne.s32.totalorder %s97, %s98
      %p112 = scmp.eq.s32.totalorder %s22, 1
      %p113 = por %p111, %p112
      %p115 = scmp.ne.s32.totalorder %s98, %s114
      %p116 = scmp.eq.s32.totalorder %s22, 0
      %p117 = por %p115, %p116
      %s118 = ssub.s32 %s16, %s23
      %p119 = scmp.eq.s32.totalorder %s118, 0
      %s121 = sadd.s32 %s120, 1
      %s122 = scalar_select %p119, %s120, %s121
      %p125 = pneg %p119
      %p126 = scmp.eq.s32.totalorder %s16, 1
      %p127 = por %p125, %p126
      %p128 = scmp.ne.s32.totalorder %s120, %s123
      %p129 = scmp.eq.s32.totalorder %s16, 0
      %p130 = por %p128, %p129
      %p131 = scmp.ne.s32.totalorder %s120, %s123
      %p132 = scmp.eq.s32.totalorder %s21, 1
      %p133 = por %p131, %p132
      %p134 = scmp.ne.s32.totalorder %s123, %s124
      %p135 = scmp.eq.s32.totalorder %s21, 0
      %p136 = por %p134, %p135
      %p137 = scmp.ne.s32.totalorder %s123, %s124
      %p138 = scmp.eq.s32.totalorder %s22, 1
      %p139 = por %p137, %p138
      %p141 = scmp.ne.s32.totalorder %s124, %s140
      %p142 = scmp.eq.s32.totalorder %s22, 0
      %p143 = por %p141, %p142
      %s144 = ssub.s32 %s16, %s23
      %p145 = scmp.eq.s32.totalorder %s144, 0
      %s147 = sadd.s32 %s146, 1
      %s148 = scalar_select %p145, %s146, %s147
      %p151 = pneg %p145
      %p152 = scmp.eq.s32.totalorder %s16, 1
      %p153 = por %p151, %p152
      %p154 = scmp.ne.s32.totalorder %s146, %s149
      %p155 = scmp.eq.s32.totalorder %s16, 0
      %p156 = por %p154, %p155
      %p157 = scmp.ne.s32.totalorder %s146, %s149
      %p158 = scmp.eq.s32.totalorder %s21, 1
      %p159 = por %p157, %p158
      %p160 = scmp.ne.s32.totalorder %s149, %s150
      %p161 = scmp.eq.s32.totalorder %s21, 0
      %p162 = por %p160, %p161
      %p163 = scmp.ne.s32.totalorder %s149, %s150
      %p164 = scmp.eq.s32.totalorder %s22, 1
      %p165 = por %p163, %p164
      %p167 = scmp.ne.s32.totalorder %s150, %s166
      %p168 = scmp.eq.s32.totalorder %s22, 0
      %p169 = por %p167, %p168
      %s170 = ssub.s32 %s16, %s23
      %p171 = scmp.eq.s32.totalorder %s170, 0
      %s173 = sadd.s32 %s172, 1
      %s174 = scalar_select %p171, %s172, %s173
      %p177 = pneg %p171
      %p178 = scmp.eq.s32.totalorder %s16, 1
      %p179 = por %p177, %p178
      %p180 = scmp.ne.s32.totalorder %s172, %s175
      %p181 = scmp.eq.s32.totalorder %s16, 0
      %p182 = por %p180, %p181
      %p183 = scmp.ne.s32.totalorder %s172, %s175
      %p184 = scmp.eq.s32.totalorder %s21, 1
      %p185 = por %p183, %p184
      %p186 = scmp.ne.s32.totalorder %s175, %s176
      %p187 = scmp.eq.s32.totalorder %s21, 0
      %p188 = por %p186, %p187
      %p189 = scmp.ne.s32.totalorder %s175, %s176
      %p190 = scmp.eq.s32.totalorder %s22, 1
      %p191 = por %p189, %p190
      %p193 = scmp.ne.s32.totalorder %s176, %s192
      %p194 = scmp.eq.s32.totalorder %s22, 0
      %p195 = por %p193, %p194
      %p196 = scmp.le.s32.totalorder 1, %s16
      %p197 = scmp.lt.s32.totalorder %s16, 3
      %p198 = pnand %p196, %p197
      %p199 = pneg %p198
      // Predicated region
      $region9: #{tpu_custom_call.1} parent=5 // pred_check
        _
      $region10: #{tpu_custom_call.1} parent=5 // pred_check_branch
        %201 = sbr.rel (%p198) target = $region12
      $region11: #{tpu_custom_call.1} parent=5 // pred_region
        %s202 = ssub.s32 %s16, 1
        // Predicated region
        $region13: #{tpu_custom_call.1} parent=11 // pred_check
          %p203 = pneg %p63
        $region14: #{tpu_custom_call.1} parent=11 // pred_check_branch
          %205 = sbr.rel (%p203) target = $region16
        $region15: #{tpu_custom_call.1} parent=11 // pred_region
          _
        $region16: #{tpu_custom_call.1} parent=11 // pred_fallthru
          _
        // Predicated region
        $region17: #{tpu_custom_call.1} parent=11 // pred_check
          %p206 = pneg %p84
        $region18: #{tpu_custom_call.1} parent=11 // pred_check_branch
          %208 = sbr.rel (%p206) target = $region20
        $region19: #{tpu_custom_call.1} parent=11 // pred_region
          _
        $region20: #{tpu_custom_call.1} parent=11 // pred_fallthru
          _
      $region12: #{tpu_custom_call.1} parent=5 // pred_fallthru
        _
      %p209 = scmp.lt.s32.totalorder %s16, 2
      // Predicated region
      $region21: #{tpu_custom_call.1} parent=5 // pred_check
        %p210 = pneg %p209
      $region22: #{tpu_custom_call.1} parent=5 // pred_check_branch
        %212 = sbr.rel (%p210) target = $region24
      $region23: #{tpu_custom_call.1} parent=5 // pred_region
        // Predicated region
        $region25: #{tpu_custom_call.1} parent=23 // pred_check
          %p213 = pneg %p36
        $region26: #{tpu_custom_call.1} parent=23 // pred_check_branch
          %215 = sbr.rel (%p213) target = $region28
        $region27: #{tpu_custom_call.1} parent=23 // pred_region
          %s216 = smul.u32 16, %s16
          %p217 = scmp.lt.s32.totalorder %s216, 31
          %s218 = scalar_select %p217, %s216, 31
          %s219 = smul.addr %s218, 8
          %s220 = scalar_lea.vmem %s0, %s219
          %s221 = smul.u32 16, %s16
        $region28: #{tpu_custom_call.1} parent=23 // pred_fallthru
          _
      $region24: #{tpu_custom_call.1} parent=5 // pred_fallthru
        _
      %p222 = scmp.le.s32.totalorder 1, %s16
      %p223 = scmp.lt.s32.totalorder %s16, 3
      %p224 = pnand %p222, %p223
      %p225 = pneg %p224
      // Predicated region
      $region29: #{tpu_custom_call.1} parent=5 // pred_check
        _
      $region30: #{tpu_custom_call.1} parent=5 // pred_check_branch
        %227 = sbr.rel (%p224) target = $region32
      $region31: #{tpu_custom_call.1} parent=5 // pred_region
        %s228 = ssub.s32 %s16, 1
        %s229 = smul.u32 16, %s21
        %p230 = scmp.lt.s32.totalorder %s229, 31
        %s231 = scalar_select %p230, %s229, 31
        %s232 = smul.addr %s231, 8
        %s233 = scalar_lea.vmem %s0, %s232
        %p234 = pneg %p42
        %p235 = pneg %p39
        %p236 = pneg %p63
        %p237 = pneg %p60
        %p238 = pneg %p84
        %p239 = pneg %p81
        %p240 = pneg %p110
        %p241 = pneg %p107
        %s242 = smul.u32 16, %s21
        %p243 = scmp.lt.s32.totalorder %s242, 31
        %s244 = scalar_select %p243, %s242, 31
        %s245 = smul.addr %s244, 8
        %s246 = scalar_lea.vmem %s3, %s245
        %p247 = pneg %p136
        %p248 = pneg %p133
        %s249 = smul.u32 16, %s21
        %p250 = scmp.lt.s32.totalorder %s249, 31
        %s251 = scalar_select %p250, %s249, 31
        %s252 = smul.addr %s251, 8
        %s253 = scalar_lea.vmem %s4, %s252
        %p254 = pneg %p162
        %p255 = pneg %p159
        %p256 = scmp.lt.s32.totalorder %s21, 1
        %s257 = scalar_select %p256, %s21, 1
        %s258 = scalar_lea.vmem %s5, %s257
        %p259 = pneg %p188
        %p260 = pneg %p185
        %s261 = sand.u32 %s175, 1
        %s262 = scalar_lea.sflag [#allocation3], %s261
        %s263 = sand.u32 %s175, 1
        %s264 = scalar_lea.vmem [#allocation2], %s263
        %s265 = smul.u32 16, %s21
        %p266 = scmp.lt.s32.totalorder %s265, 31
        %s267 = scalar_select %p266, %s265, 31
        %s268 = smul.addr %s267, 8
        %s269 = scalar_lea.vmem %s0, %s268
        %s270 = smul.u32 16, %s21
        %s271 = smul.u32 16, %s21
        %p272 = scmp.lt.s32.totalorder %s271, 31
        %s273 = scalar_select %p272, %s271, 31
        %s274 = smul.addr %s273, 8
        %s275 = scalar_lea.vmem %s3, %s274
        %s276 = smul.u32 16, %s21
        %s277 = smul.u32 16, %s21
        %p278 = scmp.lt.s32.totalorder %s277, 31
        %s279 = scalar_select %p278, %s277, 31
        %s280 = smul.addr %s279, 8
        %s281 = scalar_lea.vmem %s4, %s280
        %s282 = smul.u32 16, %s21
        %p283 = scmp.lt.s32.totalorder %s21, 1
        %s284 = scalar_select %p283, %s21, 1
        %s285 = scalar_lea.vmem %s5, %s284
        %v286 = vld [vmem:[%s269] sm:$0xff]
        %v287 = vld [vmem:[%s269 + $0x8] sm:$0xff]
        %v288 = vld [vmem:[%s269 + $0x10] sm:$0xff]
        %v289 = vld [vmem:[%s269 + $0x18] sm:$0xff]
        %v290 = vld [vmem:[%s269 + $0x20] sm:$0xff]
        %v291 = vld [vmem:[%s269 + $0x28] sm:$0xff]
        %v292 = vld [vmem:[%s269 + $0x30] sm:$0xff]
        %v293 = vld [vmem:[%s269 + $0x38] sm:$0xff]
        %v294 = vld [vmem:[%s269 + $0x40] sm:$0xff]
        %v295 = vld [vmem:[%s269 + $0x48] sm:$0xff]
        %v296 = vld [vmem:[%s269 + $0x50] sm:$0xff]
        %v297 = vld [vmem:[%s269 + $0x58] sm:$0xff]
        %v298 = vld [vmem:[%s269 + $0x60] sm:$0xff]
        %v299 = vld [vmem:[%s269 + $0x68] sm:$0xff]
        %v300 = vld [vmem:[%s269 + $0x70] sm:$0xff]
        %v301 = vld [vmem:[%s269 + $0x78] sm:$0xff]
        %v302 = vld [vmem:[%s1] sm:$0xff]
        %v303 = vld [vmem:[%s1 + $0x8] sm:$0xff]
        %v304 = vld [vmem:[%s1 + $0x10] sm:$0xff]
        %v305 = vld [vmem:[%s1 + $0x18] sm:$0xff]
        %v306 = vld [vmem:[%s1 + $0x20] sm:$0xff]
        %v307 = vld [vmem:[%s1 + $0x28] sm:$0xff]
        %v308 = vld [vmem:[%s1 + $0x30] sm:$0xff]
        %v309 = vld [vmem:[%s1 + $0x38] sm:$0xff]
        %v310 = vld [vmem:[%s2] sm:$0x1]
        %vm311 = vcmask 261120
        %v313 = vsel %vm311, %v286, 0
        %v316 = vsel %vm311, %v287, 0
        %v319 = vsel %vm311, %v288, 0
        %v322 = vsel %vm311, %v289, 0
        %v325 = vsel %vm311, %v290, 0
        %v328 = vsel %vm311, %v291, 0
        %v331 = vsel %vm311, %v292, 0
        %v334 = vsel %vm311, %v293, 0
        %v337 = vsel %vm311, %v294, 0
        %v340 = vsel %vm311, %v295, 0
        %v343 = vsel %vm311, %v296, 0
        %v346 = vsel %vm311, %v297, 0
        %v349 = vsel %vm311, %v298, 0
        %v352 = vsel %vm311, %v299, 0
        %v355 = vsel %vm311, %v300, 0
        %v358 = vsel %vm311, %v301, 0
        %v361 = vsel %vm311, %v302, 0
        %v364 = vsel %vm311, %v303, 0
        %v367 = vsel %vm311, %v304, 0
        %v370 = vsel %vm311, %v305, 0
        %v373 = vsel %vm311, %v306, 0
        %v376 = vsel %vm311, %v307, 0
        %v379 = vsel %vm311, %v308, 0
        %v382 = vsel %vm311, %v309, 0
        %384 = vmatprep.subr.mxu0 0.0
        %385 = vmatpush1.xpose.msra.mxu0 %v361
        %386 = vmatprep.subr.mxu0 0.0
        %387 = vmatpush1.xpose.msra.mxu0 %v364
        %388 = vmatprep.subr.mxu0 0.0
        %389 = vmatpush1.xpose.msra.mxu0 %v367
        %390 = vmatprep.subr.mxu0 0.0
        %391 = vmatpush1.xpose.msra.mxu0 %v370
        %392 = vmatprep.subr.mxu0 0.0
        %393 = vmatpush1.xpose.msra.mxu0 %v373
        %394 = vmatprep.subr.mxu0 0.0
        %395 = vmatpush1.xpose.msra.mxu0 %v376
        %396 = vmatprep.subr.mxu0 0.0
        %397 = vmatpush1.xpose.msra.mxu0 %v379
        %398 = vmatprep.subr.mxu0 0.0
        %399 = vmatpush1.xpose.msra.mxu0 %v382
        %400 = vmatprep.subr.mxu0 0.0
        %401 = vmatpush1.xpose.msra.mxu0 0.0
        %402 = vmatprep.subr.mxu0 0.0
        %403 = vmatpush1.xpose.msra.mxu0 0.0
        %404 = vmatprep.subr.mxu0 0.0
        %405 = vmatpush1.xpose.msra.mxu0 0.0
        %406 = vmatprep.subr.mxu0 0.0
        %407 = vmatpush1.xpose.msra.mxu0 0.0
        %408 = vmatprep.subr.mxu0 0.0
        %409 = vmatpush1.xpose.msra.mxu0 0.0
        %410 = vmatprep.subr.mxu0 0.0
        %411 = vmatpush1.xpose.msra.mxu0 0.0
        %412 = vmatprep.subr.mxu0 0.0
        %413 = vmatpush1.xpose.msra.mxu0 0.0
        %414 = vmatprep.subr.mxu0 0.0
        %415 = vmatpush1.xpose.msra.mxu0 0.0
        %416 = vmatprep.subr.mxu0 0.0
        %417 = vmatpush1.xpose.msra.mxu0 0.0
        %418 = vmatprep.subr.mxu0 0.0
        %419 = vmatpush1.xpose.msra.mxu0 0.0
        %420 = vmatprep.subr.mxu0 0.0
        %421 = vmatpush1.xpose.msra.mxu0 0.0
        %422 = vmatprep.subr.mxu0 0.0
        %423 = vmatpush1.xpose.msra.mxu0 0.0
        %424 = vmatprep.subr.mxu0 0.0
        %425 = vmatpush1.xpose.msra.mxu0 0.0
        %426 = vmatprep.subr.mxu0 0.0
        %427 = vmatpush1.xpose.msra.mxu0 0.0
        %428 = vmatprep.subr.mxu0 0.0
        %429 = vmatpush1.xpose.msra.mxu0 0.0
        %430 = vmatprep.subr.mxu0 0.0
        %431 = vmatpush1.xpose.msra.mxu0 0.0
        %432 = vmatprep.subr.mxu0 0.0
        %433 = vmatpush1.xpose.msra.mxu0 0.0
        %434 = vmatprep.subr.mxu0 0.0
        %435 = vmatpush1.xpose.msra.mxu0 0.0
        %436 = vmatprep.subr.mxu0 0.0
        %437 = vmatpush1.xpose.msra.mxu0 0.0
        %438 = vmatprep.subr.mxu0 0.0
        %439 = vmatpush1.xpose.msra.mxu0 0.0
        %440 = vmatprep.subr.mxu0 0.0
        %441 = vmatpush1.xpose.msra.mxu0 0.0
        %442 = vmatprep.subr.mxu0 0.0
        %443 = vmatpush1.xpose.msra.mxu0 0.0
        %444 = vmatprep.subr.mxu0 0.0
        %445 = vmatpush1.xpose.msra.mxu0 0.0
        %446 = vmatprep.subr.mxu0 0.0
        %447 = vmatpush1.xpose.msra.mxu0 0.0
        %448 = vmatprep.mubr.f32.mxu0 0.0
        %449 = vmatmul.mubr.f32.gmra.mrb[0].mxu0 %v313
        %v450 = vpop.f32.mrb[0].mxu0
        %v451 = vadd.f32 0.0, %v450
        %v452 = vpop.f32.mrb[0].mxu0
        %453 = vmatprep.mubr.f32.mxu0 0.0
        %454 = vmatmul.mubr.f32.gmra.mrb[0].mxu0 %v316
        %v455 = vpop.f32.mrb[0].mxu0
        %v456 = vadd.f32 0.0, %v455
        %v457 = vpop.f32.mrb[0].mxu0
        %458 = vmatprep.mubr.f32.mxu0 0.0
        %459 = vmatmul.mubr.f32.gmra.mrb[0].mxu0 %v319
        %v460 = vpop.f32.mrb[0].mxu0
        %v461 = vadd.f32 0.0, %v460
        %v462 = vpop.f32.mrb[0].mxu0
        %463 = vmatprep.mubr.f32.mxu0 0.0
        %464 = vmatmul.mubr.f32.gmra.mrb[0].mxu0 %v322
        %v465 = vpop.f32.mrb[0].mxu0
        %v466 = vadd.f32 0.0, %v465
        %v467 = vpop.f32.mrb[0].mxu0
        %468 = vmatprep.mubr.f32.mxu0 0.0
        %469 = vmatmul.mubr.f32.gmra.mrb[0].mxu0 %v325
        %v470 = vpop.f32.mrb[0].mxu0
        %v471 = vadd.f32 0.0, %v470
        %v472 = vpop.f32.mrb[0].mxu0
        %473 = vmatprep.mubr.f32.mxu0 0.0
        %474 = vmatmul.mubr.f32.gmra.mrb[0].mxu0 %v328
        %v475 = vpop.f32.mrb[0].mxu0
        %v476 = vadd.f32 0.0, %v475
        %v477 = vpop.f32.mrb[0].mxu0
        %478 = vmatprep.mubr.f32.mxu0 0.0
        %479 = vmatmul.mubr.f32.gmra.mrb[0].mxu0 %v331
        %v480 = vpop.f32.mrb[0].mxu0
        %v481 = vadd.f32 0.0, %v480
        %v482 = vpop.f32.mrb[0].mxu0
        %483 = vmatprep.mubr.f32.mxu0 0.0
        %484 = vmatmul.mubr.f32.gmra.mrb[0].mxu0 %v334
        %v485 = vpop.f32.mrb[0].mxu0
        %v486 = vadd.f32 0.0, %v485
        %v487 = vpop.f32.mrb[0].mxu0
        %488 = vmatprep.mubr.f32.mxu0 0.0
        %489 = vmatmul.mubr.f32.gmra.mrb[0].mxu0 %v337
        %v490 = vpop.f32.mrb[0].mxu0
        %v491 = vadd.f32 0.0, %v490
        %v492 = vpop.f32.mrb[0].mxu0
        %493 = vmatprep.mubr.f32.mxu0 0.0
        %494 = vmatmul.mubr.f32.gmra.mrb[0].mxu0 %v340
        %v495 = vpop.f32.mrb[0].mxu0
        %v496 = vadd.f32 0.0, %v495
        %v497 = vpop.f32.mrb[0].mxu0
        %498 = vmatprep.mubr.f32.mxu0 0.0
        %499 = vmatmul.mubr.f32.gmra.mrb[0].mxu0 %v343
        %v500 = vpop.f32.mrb[0].mxu0
        %v501 = vadd.f32 0.0, %v500
        %v502 = vpop.f32.mrb[0].mxu0
        %503 = vmatprep.mubr.f32.mxu0 0.0
        %504 = vmatmul.mubr.f32.gmra.mrb[0].mxu0 %v346
        %v505 = vpop.f32.mrb[0].mxu0
        %v506 = vadd.f32 0.0, %v505
        %v507 = vpop.f32.mrb[0].mxu0
        %508 = vmatprep.mubr.f32.mxu0 0.0
        %509 = vmatmul.mubr.f32.gmra.mrb[0].mxu0 %v349
        %v510 = vpop.f32.mrb[0].mxu0
        %v511 = vadd.f32 0.0, %v510
        %v512 = vpop.f32.mrb[0].mxu0
        %513 = vmatprep.mubr.f32.mxu0 0.0
        %514 = vmatmul.mubr.f32.gmra.mrb[0].mxu0 %v352
        %v515 = vpop.f32.mrb[0].mxu0
        %v516 = vadd.f32 0.0, %v515
        %v517 = vpop.f32.mrb[0].mxu0
        %518 = vmatprep.mubr.f32.mxu0 0.0
        %519 = vmatmul.mubr.f32.gmra.mrb[0].mxu0 %v355
        %v520 = vpop.f32.mrb[0].mxu0
        %v521 = vadd.f32 0.0, %v520
        %v522 = vpop.f32.mrb[0].mxu0
        %523 = vmatprep.mubr.f32.mxu0 0.0
        %524 = vmatmul.mubr.f32.gmra.mrb[0].mxu0 %v358
        %v525 = vpop.f32.mrb[0].mxu0
        %v526 = vadd.f32 0.0, %v525
        %v527 = vpop.f32.mrb[0].mxu0
        %528 = vdwg.mxu0
        %v530 = vlaneseq
        %v531 = vshrl.u32 %v530, 7
        %v532 = vsub.s32 0, %v531
        %v533 = vrot.slane %v310, %v532
        %v535 = vsub.f32 %v533, %v451
        %v536 = vsub.f32 %v533, %v456
        %v537 = vsub.f32 %v533, %v461
        %v538 = vsub.f32 %v533, %v466
        %v539 = vsub.f32 %v533, %v471
        %v540 = vsub.f32 %v533, %v476
        %v541 = vsub.f32 %v533, %v481
        %v542 = vsub.f32 %v533, %v486
        %v543 = vsub.f32 %v533, %v491
        %v544 = vsub.f32 %v533, %v496
        %v545 = vsub.f32 %v533, %v501
        %v546 = vsub.f32 %v533, %v506
        %v547 = vsub.f32 %v533, %v511
        %v548 = vsub.f32 %v533, %v516
        %v549 = vsub.f32 %v533, %v521
        %v550 = vsub.f32 %v533, %v526
        %vm551 = vcmask 523264
        %v552 = vsel %vm551, %v535, inf
        %553 = vmin.index.xlane.f32.xlu0 %v552
        %v554 = vpop.xlane.xlu0 %553
        %v555 = vsel %vm551, %v536, inf
        %556 = vmin.index.xlane.f32.xlu0 %v555
        %v557 = vpop.xlane.xlu0 %556
        %v558 = vsel %vm551, %v537, inf
        %559 = vmin.index.xlane.f32.xlu0 %v558
        %v560 = vpop.xlane.xlu0 %559
        %v561 = vsel %vm551, %v538, inf
        %562 = vmin.index.xlane.f32.xlu0 %v561
        %v563 = vpop.xlane.xlu0 %562
        %v564 = vsel %vm551, %v539, inf
        %565 = vmin.index.xlane.f32.xlu0 %v564
        %v566 = vpop.xlane.xlu0 %565
        %v567 = vsel %vm551, %v540, inf
        %568 = vmin.index.xlane.f32.xlu0 %v567
        %v569 = vpop.xlane.xlu0 %568
        %v570 = vsel %vm551, %v541, inf
        %571 = vmin.index.xlane.f32.xlu0 %v570
        %v572 = vpop.xlane.xlu0 %571
        %v573 = vsel %vm551, %v542, inf
        %574 = vmin.index.xlane.f32.xlu0 %v573
        %v575 = vpop.xlane.xlu0 %574
        %v576 = vsel %vm551, %v543, inf
        %577 = vmin.index.xlane.f32.xlu0 %v576
        %v578 = vpop.xlane.xlu0 %577
        %v579 = vsel %vm551, %v544, inf
        %580 = vmin.index.xlane.f32.xlu0 %v579
        %v581 = vpop.xlane.xlu0 %580
        %v582 = vsel %vm551, %v545, inf
        %583 = vmin.index.xlane.f32.xlu0 %v582
        %v584 = vpop.xlane.xlu0 %583
        %v585 = vsel %vm551, %v546, inf
        %586 = vmin.index.xlane.f32.xlu0 %v585
        %v587 = vpop.xlane.xlu0 %586
        %v588 = vsel %vm551, %v547, inf
        %589 = vmin.index.xlane.f32.xlu0 %v588
        %v590 = vpop.xlane.xlu0 %589
        %v591 = vsel %vm551, %v548, inf
        %592 = vmin.index.xlane.f32.xlu0 %v591
        %v593 = vpop.xlane.xlu0 %592
        %v594 = vsel %vm551, %v549, inf
        %595 = vmin.index.xlane.f32.xlu0 %v594
        %v596 = vpop.xlane.xlu0 %595
        %v597 = vsel %vm551, %v550, inf
        %598 = vmin.index.xlane.f32.xlu0 %v597
        %v599 = vpop.xlane.xlu0 %598
        %v600 = vlaneseq
        %v601 = vand.u32 %v600, 127
        %vm602 = vcmp.eq.s32.totalorder %v601, %v554
        %vm603 = vcmp.eq.s32.totalorder %v601, %v557
        %vm604 = vcmp.eq.s32.totalorder %v601, %v560
        %vm605 = vcmp.eq.s32.totalorder %v601, %v563
        %vm606 = vcmp.eq.s32.totalorder %v601, %v566
        %vm607 = vcmp.eq.s32.totalorder %v601, %v569
        %vm608 = vcmp.eq.s32.totalorder %v601, %v572
        %vm609 = vcmp.eq.s32.totalorder %v601, %v575
        %vm610 = vcmp.eq.s32.totalorder %v601, %v578
        %vm611 = vcmp.eq.s32.totalorder %v601, %v581
        %vm612 = vcmp.eq.s32.totalorder %v601, %v584
        %vm613 = vcmp.eq.s32.totalorder %v601, %v587
        %vm614 = vcmp.eq.s32.totalorder %v601, %v590
        %vm615 = vcmp.eq.s32.totalorder %v601, %v593
        %vm616 = vcmp.eq.s32.totalorder %v601, %v596
        %vm617 = vcmp.eq.s32.totalorder %v601, %v599
        %v618 = vsel %vm602, 1, 0
        %v619 = vsel %vm603, 1, 0
        %v620 = vsel %vm604, 1, 0
        %v621 = vsel %vm605, 1, 0
        %v622 = vsel %vm606, 1, 0
        %v623 = vsel %vm607, 1, 0
        %v624 = vsel %vm608, 1, 0
        %v625 = vsel %vm609, 1, 0
        %v626 = vsel %vm610, 1, 0
        %v627 = vsel %vm611, 1, 0
        %v628 = vsel %vm612, 1, 0
        %v629 = vsel %vm613, 1, 0
        %v630 = vsel %vm614, 1, 0
        %v631 = vsel %vm615, 1, 0
        %v632 = vsel %vm616, 1, 0
        %v633 = vsel %vm617, 1, 0
        %v634 = vcvt.s32.f32 %v618
        %v635 = vcvt.s32.f32 %v619
        %v636 = vcvt.s32.f32 %v620
        %v637 = vcvt.s32.f32 %v621
        %v638 = vcvt.s32.f32 %v622
        %v639 = vcvt.s32.f32 %v623
        %v640 = vcvt.s32.f32 %v624
        %v641 = vcvt.s32.f32 %v625
        %v642 = vcvt.s32.f32 %v626
        %v643 = vcvt.s32.f32 %v627
        %v644 = vcvt.s32.f32 %v628
        %v645 = vcvt.s32.f32 %v629
        %v646 = vcvt.s32.f32 %v630
        %v647 = vcvt.s32.f32 %v631
        %v648 = vcvt.s32.f32 %v632
        %v649 = vcvt.s32.f32 %v633
        %v651 = vsel %vm551, %v634, 0
        %v654 = vsel %vm551, %v635, 0
        %v657 = vsel %vm551, %v636, 0
        %v660 = vsel %vm551, %v637, 0
        %v663 = vsel %vm551, %v638, 0
        %v666 = vsel %vm551, %v639, 0
        %v669 = vsel %vm551, %v640, 0
        %v672 = vsel %vm551, %v641, 0
        %v675 = vsel %vm551, %v642, 0
        %v678 = vsel %vm551, %v643, 0
        %v681 = vsel %vm551, %v644, 0
        %v684 = vsel %vm551, %v645, 0
        %v687 = vsel %vm551, %v646, 0
        %v690 = vsel %vm551, %v647, 0
        %v693 = vsel %vm551, %v648, 0
        %v696 = vsel %vm551, %v649, 0
        %698 = vmatprep.subr.mxu0 0.0
        %699 = vmatpush1.msra.mxu0 %v302
        %700 = vmatprep.subr.mxu0 0.0
        %701 = vmatpush1.msra.mxu0 %v303
        %702 = vmatprep.subr.mxu0 0.0
        %703 = vmatpush1.msra.mxu0 %v304
        %704 = vmatprep.subr.mxu0 0.0
        %705 = vmatpush1.msra.mxu0 %v305
        %706 = vmatprep.subr.mxu0 0.0
        %707 = vmatpush1.msra.mxu0 %v306
        %708 = vmatprep.subr.mxu0 0.0
        %709 = vmatpush1.msra.mxu0 %v307
        %710 = vmatprep.subr.mxu0 0.0
        %711 = vmatpush1.msra.mxu0 %v308
        %712 = vmatprep.subr.mxu0 0.0
        %713 = vmatpush1.msra.mxu0 %v309
        %714 = vmatprep.subr.mxu0 0.0
        %715 = vmatpush1.msra.mxu0 0.0
        %716 = vmatprep.subr.mxu0 0.0
        %717 = vmatpush1.msra.mxu0 0.0
        %718 = vmatprep.subr.mxu0 0.0
        %719 = vmatpush1.msra.mxu0 0.0
        %720 = vmatprep.subr.mxu0 0.0
        %721 = vmatpush1.msra.mxu0 0.0
        %722 = vmatprep.subr.mxu0 0.0
        %723 = vmatpush1.msra.mxu0 0.0
        %724 = vmatprep.subr.mxu0 0.0
        %725 = vmatpush1.msra.mxu0 0.0
        %726 = vmatprep.subr.mxu0 0.0
        %727 = vmatpush1.msra.mxu0 0.0
        %728 = vmatprep.subr.mxu0 0.0
        %729 = vmatpush1.msra.mxu0 0.0
        %730 = vmatprep.subr.mxu0 0.0
        %731 = vmatpush1.msra.mxu0 0.0
        %732 = vmatprep.subr.mxu0 0.0
        %733 = vmatpush1.msra.mxu0 0.0
        %734 = vmatprep.subr.mxu0 0.0
        %735 = vmatpush1.msra.mxu0 0.0
        %736 = vmatprep.subr.mxu0 0.0
        %737 = vmatpush1.msra.mxu0 0.0
        %738 = vmatprep.subr.mxu0 0.0
        %739 = vmatpush1.msra.mxu0 0.0
        %740 = vmatprep.subr.mxu0 0.0
        %741 = vmatpush1.msra.mxu0 0.0
        %742 = vmatprep.subr.mxu0 0.0
        %743 = vmatpush1.msra.mxu0 0.0
        %744 = vmatprep.subr.mxu0 0.0
        %745 = vmatpush1.msra.mxu0 0.0
        %746 = vmatprep.subr.mxu0 0.0
        %747 = vmatpush1.msra.mxu0 0.0
        %748 = vmatprep.subr.mxu0 0.0
        %749 = vmatpush1.msra.mxu0 0.0
        %750 = vmatprep.subr.mxu0 0.0
        %751 = vmatpush1.msra.mxu0 0.0
        %752 = vmatprep.subr.mxu0 0.0
        %753 = vmatpush1.msra.mxu0 0.0
        %754 = vmatprep.subr.mxu0 0.0
        %755 = vmatpush1.msra.mxu0 0.0
        %756 = vmatprep.subr.mxu0 0.0
        %757 = vmatpush1.msra.mxu0 0.0
        %758 = vmatprep.subr.mxu0 0.0
        %759 = vmatpush1.msra.mxu0 0.0
        %760 = vmatprep.subr.mxu0 0.0
        %761 = vmatpush1.msra.mxu0 0.0
        %762 = vmatprep.mubr.f32.mxu0 0.0
        %763 = vmatmul.mubr.f32.gmra.mrb[0].mxu0 %v651
        %v764 = vpop.f32.mrb[0].mxu0
        %v765 = vadd.f32 0.0, %v764
        %v766 = vpop.f32.mrb[0].mxu0
        %767 = vmatprep.mubr.f32.mxu0 0.0
        %768 = vmatmul.mubr.f32.gmra.mrb[0].mxu0 %v654
        %v769 = vpop.f32.mrb[0].mxu0
        %v770 = vadd.f32 0.0, %v769
        %v771 = vpop.f32.mrb[0].mxu0
        %772 = vmatprep.mubr.f32.mxu0 0.0
        %773 = vmatmul.mubr.f32.gmra.mrb[0].mxu0 %v657
        %v774 = vpop.f32.mrb[0].mxu0
        %v775 = vadd.f32 0.0, %v774
        %v776 = vpop.f32.mrb[0].mxu0
        %777 = vmatprep.mubr.f32.mxu0 0.0
        %778 = vmatmul.mubr.f32.gmra.mrb[0].mxu0 %v660
        %v779 = vpop.f32.mrb[0].mxu0
        %v780 = vadd.f32 0.0, %v779
        %v781 = vpop.f32.mrb[0].mxu0
        %782 = vmatprep.mubr.f32.mxu0 0.0
        %783 = vmatmul.mubr.f32.gmra.mrb[0].mxu0 %v663
        %v784 = vpop.f32.mrb[0].mxu0
        %v785 = vadd.f32 0.0, %v784
        %v786 = vpop.f32.mrb[0].mxu0
        %787 = vmatprep.mubr.f32.mxu0 0.0
        %788 = vmatmul.mubr.f32.gmra.mrb[0].mxu0 %v666
        %v789 = vpop.f32.mrb[0].mxu0
        %v790 = vadd.f32 0.0, %v789
        %v791 = vpop.f32.mrb[0].mxu0
        %792 = vmatprep.mubr.f32.mxu0 0.0
        %793 = vmatmul.mubr.f32.gmra.mrb[0].mxu0 %v669
        %v794 = vpop.f32.mrb[0].mxu0
        %v795 = vadd.f32 0.0, %v794
        %v796 = vpop.f32.mrb[0].mxu0
        %797 = vmatprep.mubr.f32.mxu0 0.0
        %798 = vmatmul.mubr.f32.gmra.mrb[0].mxu0 %v672
        %v799 = vpop.f32.mrb[0].mxu0
        %v800 = vadd.f32 0.0, %v799
        %v801 = vpop.f32.mrb[0].mxu0
        %802 = vmatprep.mubr.f32.mxu0 0.0
        %803 = vmatmul.mubr.f32.gmra.mrb[0].mxu0 %v675
        %v804 = vpop.f32.mrb[0].mxu0
        %v805 = vadd.f32 0.0, %v804
        %v806 = vpop.f32.mrb[0].mxu0
        %807 = vmatprep.mubr.f32.mxu0 0.0
        %808 = vmatmul.mubr.f32.gmra.mrb[0].mxu0 %v678
        %v809 = vpop.f32.mrb[0].mxu0
        %v810 = vadd.f32 0.0, %v809
        %v811 = vpop.f32.mrb[0].mxu0
        %812 = vmatprep.mubr.f32.mxu0 0.0
        %813 = vmatmul.mubr.f32.gmra.mrb[0].mxu0 %v681
        %v814 = vpop.f32.mrb[0].mxu0
        %v815 = vadd.f32 0.0, %v814
        %v816 = vpop.f32.mrb[0].mxu0
        %817 = vmatprep.mubr.f32.mxu0 0.0
        %818 = vmatmul.mubr.f32.gmra.mrb[0].mxu0 %v684
        %v819 = vpop.f32.mrb[0].mxu0
        %v820 = vadd.f32 0.0, %v819
        %v821 = vpop.f32.mrb[0].mxu0
        %822 = vmatprep.mubr.f32.mxu0 0.0
        %823 = vmatmul.mubr.f32.gmra.mrb[0].mxu0 %v687
        %v824 = vpop.f32.mrb[0].mxu0
        %v825 = vadd.f32 0.0, %v824
        %v826 = vpop.f32.mrb[0].mxu0
        %827 = vmatprep.mubr.f32.mxu0 0.0
        %828 = vmatmul.mubr.f32.gmra.mrb[0].mxu0 %v690
        %v829 = vpop.f32.mrb[0].mxu0
        %v830 = vadd.f32 0.0, %v829
        %v831 = vpop.f32.mrb[0].mxu0
        %832 = vmatprep.mubr.f32.mxu0 0.0
        %833 = vmatmul.mubr.f32.gmra.mrb[0].mxu0 %v693
        %v834 = vpop.f32.mrb[0].mxu0
        %v835 = vadd.f32 0.0, %v834
        %v836 = vpop.f32.mrb[0].mxu0
        %837 = vmatprep.mubr.f32.mxu0 0.0
        %838 = vmatmul.mubr.f32.gmra.mrb[0].mxu0 %v696
        %v839 = vpop.f32.mrb[0].mxu0
        %v840 = vadd.f32 0.0, %v839
        %v841 = vpop.f32.mrb[0].mxu0
        %842 = vdwg.mxu0
        %843 = vst.msk [vmem:[%s275] sm:$0xff] %vm311, %v765
        %844 = vst.msk [vmem:[%s275 + $0x8] sm:$0xff] %vm311, %v770
        %845 = vst.msk [vmem:[%s275 + $0x10] sm:$0xff] %vm311, %v775
        %846 = vst.msk [vmem:[%s275 + $0x18] sm:$0xff] %vm311, %v780
        %847 = vst.msk [vmem:[%s275 + $0x20] sm:$0xff] %vm311, %v785
        %848 = vst.msk [vmem:[%s275 + $0x28] sm:$0xff] %vm311, %v790
        %849 = vst.msk [vmem:[%s275 + $0x30] sm:$0xff] %vm311, %v795
        %850 = vst.msk [vmem:[%s275 + $0x38] sm:$0xff] %vm311, %v800
        %851 = vst.msk [vmem:[%s275 + $0x40] sm:$0xff] %vm311, %v805
        %852 = vst.msk [vmem:[%s275 + $0x48] sm:$0xff] %vm311, %v810
        %853 = vst.msk [vmem:[%s275 + $0x50] sm:$0xff] %vm311, %v815
        %854 = vst.msk [vmem:[%s275 + $0x58] sm:$0xff] %vm311, %v820
        %855 = vst.msk [vmem:[%s275 + $0x60] sm:$0xff] %vm311, %v825
        %856 = vst.msk [vmem:[%s275 + $0x68] sm:$0xff] %vm311, %v830
        %857 = vst.msk [vmem:[%s275 + $0x70] sm:$0xff] %vm311, %v835
        %858 = vst.msk [vmem:[%s275 + $0x78] sm:$0xff] %vm311, %v840
        %859 = vst.msk [vmem:[%s281] sm:$0xff] %vm551, %v634
        %860 = vst.msk [vmem:[%s281 + $0x8] sm:$0xff] %vm551, %v635
        %861 = vst.msk [vmem:[%s281 + $0x10] sm:$0xff] %vm551, %v636
        %862 = vst.msk [vmem:[%s281 + $0x18] sm:$0xff] %vm551, %v637
        %863 = vst.msk [vmem:[%s281 + $0x20] sm:$0xff] %vm551, %v638
        %864 = vst.msk [vmem:[%s281 + $0x28] sm:$0xff] %vm551, %v639
        %865 = vst.msk [vmem:[%s281 + $0x30] sm:$0xff] %vm551, %v640
        %866 = vst.msk [vmem:[%s281 + $0x38] sm:$0xff] %vm551, %v641
        %867 = vst.msk [vmem:[%s281 + $0x40] sm:$0xff] %vm551, %v642
        %868 = vst.msk [vmem:[%s281 + $0x48] sm:$0xff] %vm551, %v643
        %869 = vst.msk [vmem:[%s281 + $0x50] sm:$0xff] %vm551, %v644
        %870 = vst.msk [vmem:[%s281 + $0x58] sm:$0xff] %vm551, %v645
        %871 = vst.msk [vmem:[%s281 + $0x60] sm:$0xff] %vm551, %v646
        %872 = vst.msk [vmem:[%s281 + $0x68] sm:$0xff] %vm551, %v647
        %873 = vst.msk [vmem:[%s281 + $0x70] sm:$0xff] %vm551, %v648
        %874 = vst.msk [vmem:[%s281 + $0x78] sm:$0xff] %vm551, %v649
        %v875 = vsub.f32 %v765, %v286
        %v876 = vsub.f32 %v770, %v287
        %v877 = vsub.f32 %v775, %v288
        %v878 = vsub.f32 %v780, %v289
        %v879 = vsub.f32 %v785, %v290
        %v880 = vsub.f32 %v790, %v291
        %v881 = vsub.f32 %v795, %v292
        %v882 = vsub.f32 %v800, %v293
        %v883 = vsub.f32 %v805, %v294
        %v884 = vsub.f32 %v810, %v295
        %v885 = vsub.f32 %v815, %v296
        %v886 = vsub.f32 %v820, %v297
        %v887 = vsub.f32 %v825, %v298
        %v888 = vsub.f32 %v830, %v299
        %v889 = vsub.f32 %v835, %v300
        %v890 = vsub.f32 %v840, %v301
        %v891 = vmul.f32 %v875, %v875
        %v892 = vmul.f32 %v876, %v876
        %v893 = vmul.f32 %v877, %v877
        %v894 = vmul.f32 %v878, %v878
        %v895 = vmul.f32 %v879, %v879
        %v896 = vmul.f32 %v880, %v880
        %v897 = vmul.f32 %v881, %v881
        %v898 = vmul.f32 %v882, %v882
        %v899 = vmul.f32 %v883, %v883
        %v900 = vmul.f32 %v884, %v884
        %v901 = vmul.f32 %v885, %v885
        %v902 = vmul.f32 %v886, %v886
        %v903 = vmul.f32 %v887, %v887
        %v904 = vmul.f32 %v888, %v888
        %v905 = vmul.f32 %v889, %v889
        %v906 = vmul.f32 %v890, %v890
        %v907 = vsel %vm311, %v891, 0.0
        %v908 = vsel %vm311, %v892, 0.0
        %v909 = vadd.f32 %v907, %v908
        %v910 = vsel %vm311, %v893, 0.0
        %v911 = vadd.f32 %v909, %v910
        %v912 = vsel %vm311, %v894, 0.0
        %v913 = vadd.f32 %v911, %v912
        %v914 = vsel %vm311, %v895, 0.0
        %v915 = vadd.f32 %v913, %v914
        %v916 = vsel %vm311, %v896, 0.0
        %v917 = vadd.f32 %v915, %v916
        %v918 = vsel %vm311, %v897, 0.0
        %v919 = vadd.f32 %v917, %v918
        %v920 = vsel %vm311, %v898, 0.0
        %v921 = vadd.f32 %v919, %v920
        %v922 = vsel %vm311, %v899, 0.0
        %v923 = vadd.f32 %v921, %v922
        %v924 = vsel %vm311, %v900, 0.0
        %v925 = vadd.f32 %v923, %v924
        %v926 = vsel %vm311, %v901, 0.0
        %v927 = vadd.f32 %v925, %v926
        %v928 = vsel %vm311, %v902, 0.0
        %v929 = vadd.f32 %v927, %v928
        %v930 = vsel %vm311, %v903, 0.0
        %v931 = vadd.f32 %v929, %v930
        %v932 = vsel %vm311, %v904, 0.0
        %v933 = vadd.f32 %v931, %v932
        %v934 = vsel %vm311, %v905, 0.0
        %v935 = vadd.f32 %v933, %v934
        %v936 = vsel %vm311, %v906, 0.0
        %v937 = vadd.f32 %v935, %v936
        %938 = vadd.xlane.f32.xlu0 %v937
        %v939 = vpop.xlane.xlu0 %938
        %v940 = vrot.slane %v939, 4
        %v941 = vadd.f32 %v939, %v940
        %v942 = vrot.slane %v941, 2
        %v943 = vadd.f32 %v941, %v942
        %v944 = vrot.slane %v943, 1
        %v945 = vadd.f32 %v943, %v944
        %s946 = vtos %v945
        %v947 = vstv %s946
        %vm948 = vcmask 0
        %949 = vst.msk [vmem:[%s285] sm:$0x1] %vm948, %v947
        %v950 = vsel %vm551, %v634, 0.0
        %v951 = vsel %vm551, %v635, 0.0
        %v952 = vadd.f32 %v950, %v951
        %v953 = vsel %vm551, %v636, 0.0
        %v954 = vadd.f32 %v952, %v953
        %v955 = vsel %vm551, %v637, 0.0
        %v956 = vadd.f32 %v954, %v955
        %v957 = vsel %vm551, %v638, 0.0
        %v958 = vadd.f32 %v956, %v957
        %v959 = vsel %vm551, %v639, 0.0
        %v960 = vadd.f32 %v958, %v959
        %v961 = vsel %vm551, %v640, 0.0
        %v962 = vadd.f32 %v960, %v961
        %v963 = vsel %vm551, %v641, 0.0
        %v964 = vadd.f32 %v962, %v963
        %v965 = vsel %vm551, %v642, 0.0
        %v966 = vadd.f32 %v964, %v965
        %v967 = vsel %vm551, %v643, 0.0
        %v968 = vadd.f32 %v966, %v967
        %v969 = vsel %vm551, %v644, 0.0
        %v970 = vadd.f32 %v968, %v969
        %v971 = vsel %vm551, %v645, 0.0
        %v972 = vadd.f32 %v970, %v971
        %v973 = vsel %vm551, %v646, 0.0
        %v974 = vadd.f32 %v972, %v973
        %v975 = vsel %vm551, %v647, 0.0
        %v976 = vadd.f32 %v974, %v975
        %v977 = vsel %vm551, %v648, 0.0
        %v978 = vadd.f32 %v976, %v977
        %v979 = vsel %vm551, %v649, 0.0
        %v980 = vadd.f32 %v978, %v979
        %v981 = vrot.slane %v980, 4
        %v982 = vadd.f32 %v980, %v981
        %v983 = vrot.slane %v982, 2
        %v984 = vadd.f32 %v982, %v983
        %v985 = vrot.slane %v984, 1
        %v986 = vadd.f32 %v984, %v985
        %vm987 = vcmask 516096
        %988 = vst.msk [vmem:[%s264] sm:$0x1] %vm987, %v986
        %s989 = smul.u32 16, %s21
        %p990 = scmp.lt.s32.totalorder %s989, 31
        %s991 = scalar_select %p990, %s989, 31
        %s992 = smul.addr %s991, 8
        %s993 = scalar_lea.vmem %s3, %s992
        %s994 = smul.u32 16, %s21
        %p995 = scmp.lt.s32.totalorder %s994, 31
        %s996 = scalar_select %p995, %s994, 31
        %s997 = smul.addr %s996, 8
        %s998 = scalar_lea.vmem %s4, %s997
        %p999 = scmp.lt.s32.totalorder %s21, 1
        %s1000 = scalar_select %p999, %s21, 1
        %s1001 = scalar_lea.vmem %s5, %s1000
        %s1002 = sand.u32 %s175, 1
        %s1003 = scalar_lea.sflag [#allocation3], %s1002
        %s1004 = sand.u32 %s175, 1
        %s1005 = scalar_lea.vmem [#allocation2], %s1004
        // Predicated region
        $region33: #{tpu_custom_call.1} parent=31 // pred_check
          %p1006 = pneg %p107
        $region34: #{tpu_custom_call.1} parent=31 // pred_check_branch
          %1008 = sbr.rel (%p1006) target = $region36
        $region35: #{tpu_custom_call.1} parent=31 // pred_region
          %s1009 = smul.u32 16, %s21
        $region36: #{tpu_custom_call.1} parent=31 // pred_fallthru
          _
        // Predicated region
        $region37: #{tpu_custom_call.1} parent=31 // pred_check
          %p1010 = pneg %p133
        $region38: #{tpu_custom_call.1} parent=31 // pred_check_branch
          %1012 = sbr.rel (%p1010) target = $region40
        $region39: #{tpu_custom_call.1} parent=31 // pred_region
          %s1013 = smul.u32 16, %s21
        $region40: #{tpu_custom_call.1} parent=31 // pred_fallthru
          _
        // Predicated region
        $region41: #{tpu_custom_call.1} parent=31 // pred_check
          %p1014 = pneg %p159
        $region42: #{tpu_custom_call.1} parent=31 // pred_check_branch
          %1016 = sbr.rel (%p1014) target = $region44
        $region43: #{tpu_custom_call.1} parent=31 // pred_region
          _
        $region44: #{tpu_custom_call.1} parent=31 // pred_fallthru
          _
        // Predicated region
        $region45: #{tpu_custom_call.1} parent=31 // pred_check
          %p1017 = pneg %p185
        $region46: #{tpu_custom_call.1} parent=31 // pred_check_branch
          %1019 = sbr.rel (%p1017) target = $region48
        $region47: #{tpu_custom_call.1} parent=31 // pred_region
          %s1021 = ssub.s32 16, 16
          %1022 = vsyncadd %s1003, %s1021
          %s1023 = smul.addr %s21, 16
          %s1024 = scalar_lea.hbm %s6, %s1023
          %s1026 = sshll.u32 %s1005, 4
          %s1027 = int_to_ptr.vmem [resolvable:$true] %s1026
          %1029 = dma.vmem_to_hbm [thread:$0]  %s1027, 16, %s1024, %s1003
        $region48: #{tpu_custom_call.1} parent=31 // pred_fallthru
          _
      $region32: #{tpu_custom_call.1} parent=5 // pred_fallthru
        _
      %p1030 = scmp.le.s32.totalorder 2, %s16
      // Predicated region
      $region49: #{tpu_custom_call.1} parent=5 // pred_check
        %p1031 = pneg %p1030
      $region50: #{tpu_custom_call.1} parent=5 // pred_check_branch
        %1033 = sbr.rel (%p1031) target = $region52
      $region51: #{tpu_custom_call.1} parent=5 // pred_region
        %s1034 = ssub.s32 %s16, 2
        // Predicated region
        $region53: #{tpu_custom_call.1} parent=51 // pred_check
          %p1035 = pneg %p113
        $region54: #{tpu_custom_call.1} parent=51 // pred_check_branch
          %1037 = sbr.rel (%p1035) target = $region56
        $region55: #{tpu_custom_call.1} parent=51 // pred_region
          %s1038 = smul.u32 16, %s22
          %p1039 = scmp.lt.s32.totalorder %s1038, 31
          %s1040 = scalar_select %p1039, %s1038, 31
          %s1041 = smul.addr %s1040, 8
          %s1042 = scalar_lea.vmem %s3, %s1041
        $region56: #{tpu_custom_call.1} parent=51 // pred_fallthru
          _
        // Predicated region
        $region57: #{tpu_custom_call.1} parent=51 // pred_check
          %p1043 = pneg %p139
        $region58: #{tpu_custom_call.1} parent=51 // pred_check_branch
          %1045 = sbr.rel (%p1043) target = $region60
        $region59: #{tpu_custom_call.1} parent=51 // pred_region
          %s1046 = smul.u32 16, %s22
          %p1047 = scmp.lt.s32.totalorder %s1046, 31
          %s1048 = scalar_select %p1047, %s1046, 31
          %s1049 = smul.addr %s1048, 8
          %s1050 = scalar_lea.vmem %s4, %s1049
        $region60: #{tpu_custom_call.1} parent=51 // pred_fallthru
          _
        // Predicated region
        $region61: #{tpu_custom_call.1} parent=51 // pred_check
          %p1051 = pneg %p165
        $region62: #{tpu_custom_call.1} parent=51 // pred_check_branch
          %1053 = sbr.rel (%p1051) target = $region64
        $region63: #{tpu_custom_call.1} parent=51 // pred_region
          %p1054 = scmp.lt.s32.totalorder %s22, 1
          %s1055 = scalar_select %p1054, %s22, 1
          %s1056 = scalar_lea.vmem %s5, %s1055
        $region64: #{tpu_custom_call.1} parent=51 // pred_fallthru
          _
        // Predicated region
        $region65: #{tpu_custom_call.1} parent=51 // pred_check
          %p1057 = pneg %p191
        $region66: #{tpu_custom_call.1} parent=51 // pred_check_branch
          %1059 = sbr.rel (%p1057) target = $region68
        $region67: #{tpu_custom_call.1} parent=51 // pred_region
          %s1060 = sand.u32 %s176, 1
          %s1061 = scalar_lea.sflag [#allocation3], %s1060
          %s1062 = sand.u32 %s176, 1
          %s1063 = scalar_lea.vmem [#allocation2], %s1062
          %1064 = dma.done %s1061, 16
        $region68: #{tpu_custom_call.1} parent=51 // pred_fallthru
          _
      $region52: #{tpu_custom_call.1} parent=5 // pred_fallthru
        _
    $region6: #{tpu_custom_call.1} parent=1 // loop_footer
      %s20 = sadd.s32 1, %s16
    $region7: #{tpu_custom_call.1} parent=1 // loop_footer_branch
      %15 = sbr.rel target = $region3
    $region8: #{tpu_custom_call.1} parent=1 // loop_exit
      _
    %1065 = vsyncpa [#allocation3], 1
    %s1066 = scalar_lea.sflag [#allocation3], 1
    %1067 = vsyncpa %s1066, 1

</llo_original>
